<compile_context>
chip_gen: v7x
topology: tpu7x:2x2x1
jax: 0.10.0
libtpu: 0.0.40
codegen_flags: <defaults>
</compile_context>

<pallas_src>
import jax
import jax.numpy as jnp
from jax.experimental import pallas as pl
from jax.experimental.pallas import tpu as pltpu

NUM_CLASSES = 7
RESNET_FEATS = 2048      # models.resnet50().fc.in_features
INCEPTION_FEATS = 2048   # models.inception_v3().fc.in_features
HIDDEN = 512
OUT_PAD = 128            # lane-dense padded output width (sliced back to 7 in wrapper)


def combined_head_kernel(x_ref, weff_ref, beff_ref, w2_ref, b2_ref, out_ref):
    # x_ref: [TB, 3*HWp] f32 — one batch tile, channel-major, zero-padded spatial.
    hwp = x_ref.shape[1] // 3

    # Per-channel spatial sums: three lane-aligned slices -> XLU lane reductions.
    # (The 1/HW mean scale is pre-folded into w_eff in the wrapper, so zero padding
    #  of the spatial axis does not perturb the result.)
    s0 = jnp.sum(x_ref[:, 0 * hwp:1 * hwp], axis=-1, keepdims=True)   # [TB, 1]
    s1 = jnp.sum(x_ref[:, 1 * hwp:2 * hwp], axis=-1, keepdims=True)
    s2 = jnp.sum(x_ref[:, 2 * hwp:3 * hwp], axis=-1, keepdims=True)

    # K=3 projection: an MXU tile would be >97% padding, so use 3 VPU broadcast-FMAs.
    w_eff = weff_ref[...]                               # [3, HIDDEN] (already /HW)
    h = beff_ref[...] + s0 * w_eff[0:1, :]
    h = h + s1 * w_eff[1:2, :]
    h = h + s2 * w_eff[2:3, :]
    h = jnp.maximum(h, 0.0)                             # relu(fc1(concat(...)))  [TB, 512]

    # fc2: K=512 is real MXU work; output padded to 128 lanes -> unmasked vst stores.
    out_ref[...] = (
        jnp.dot(h, w2_ref[...], preferred_element_type=jnp.float32) + b2_ref[...]
    )


def combined_model_forward(x_nchw, params, *, batch_tile=8):
    B, C, H, W = x_nchw.shape
    assert C == 3
    HW = H * W
    HWp = ((HW + 127) // 128) * 128                     # lane-aligned spatial extent

    # ---- constant-fold the affine chain (mean-scale + backbones + concat + fc1) ----
    w1_top = params["w1"][:RESNET_FEATS]                 # [2048, 512]
    w1_bot = params["w1"][RESNET_FEATS:]                 # [2048, 512]
    w_eff = params["w_res"] @ w1_top + params["w_inc"] @ w1_bot                    # [3, 512]
    b_eff = params["b_res"] @ w1_top + params["b_inc"] @ w1_bot + params["b1"]     # [1, 512]
    w_eff = w_eff / float(HW)   # fold the spatial-mean 1/HW so the kernel only sums

    # ---- lane-dense padded fc2 (7 -> 128 columns; sliced back after the kernel) ----
    w2_pad = jnp.zeros((HIDDEN, OUT_PAD), jnp.float32).at[:, :NUM_CLASSES].set(params["w2"])
    b2_pad = jnp.zeros((1, OUT_PAD), jnp.float32).at[:, :NUM_CLASSES].set(params["b2"])

    # ---- batch tiling: sublane-aligned tiles; grid pipelines + shards across TCs ----
    assert batch_tile % 8 == 0, "batch_tile must be a sublane multiple (8)"
    TB = batch_tile
    Bp = ((B + TB - 1) // TB) * TB
    x = x_nchw.reshape(B, C, HW).astype(jnp.float32)
    if HWp != HW:
        x = jnp.pad(x, ((0, 0), (0, 0), (0, HWp - HW)))
    x = x.reshape(B, C * HWp)
    if Bp != B:
        x = jnp.pad(x, ((0, Bp - B), (0, 0)))
    grid = (Bp // TB,)

    cost = pl.CostEstimate(
        flops=Bp * 3 * HWp + 2 * Bp * 3 * HIDDEN + 2 * Bp * HIDDEN * OUT_PAD,
        transcendentals=0,
        bytes_accessed=4 * (x.size + w_eff.size + b_eff.size
                            + w2_pad.size + b2_pad.size + Bp * OUT_PAD),
    )

    out = pl.pallas_call(
        combined_head_kernel,
        out_shape=jax.ShapeDtypeStruct((Bp, OUT_PAD), jnp.float32),
        grid_spec=pl.GridSpec(
            grid=grid,
            in_specs=[
                pl.BlockSpec((TB, 3 * HWp), lambda b: (b, 0)),       # batch-tiled input
                pl.BlockSpec((3, HIDDEN), lambda b: (0, 0)),         # folded fc1 weight
                pl.BlockSpec((1, HIDDEN), lambda b: (0, 0)),         # folded fc1 bias
                pl.BlockSpec((HIDDEN, OUT_PAD), lambda b: (0, 0)),   # padded fc2 weight
                pl.BlockSpec((1, OUT_PAD), lambda b: (0, 0)),        # padded fc2 bias
            ],
            out_specs=pl.BlockSpec((TB, OUT_PAD), lambda b: (b, 0)),
        ),
        compiler_params=pltpu.CompilerParams(
            dimension_semantics=("parallel",),   # batch tiles shard across TCs on v7x
            vmem_limit_bytes=32 << 20,           # valid on v5e/v6e/v7x
        ),
        cost_estimate=cost,
    )(x, w_eff, b_eff, w2_pad, b2_pad)

    return out[:B, :NUM_CLASSES]


def init_params(key):
    ks = jax.random.split(key, 8)
    scale = 0.02
    return {
        # surrogate backbone projections: pooled(3) -> 2048 features each
        "w_res": scale * jax.random.normal(ks[0], (3, RESNET_FEATS), jnp.float32),
        "b_res": scale * jax.random.normal(ks[1], (1, RESNET_FEATS), jnp.float32),
        "w_inc": scale * jax.random.normal(ks[2], (3, INCEPTION_FEATS), jnp.float32),
        "b_inc": scale * jax.random.normal(ks[3], (1, INCEPTION_FEATS), jnp.float32),
        # fc1: Linear(2048 + 2048, 512)
        "w1": scale * jax.random.normal(ks[4], (RESNET_FEATS + INCEPTION_FEATS, HIDDEN), jnp.float32),
        "b1": scale * jax.random.normal(ks[5], (1, HIDDEN), jnp.float32),
        # fc2: Linear(512, num_classes)
        "w2": scale * jax.random.normal(ks[6], (HIDDEN, NUM_CLASSES), jnp.float32),
        "b2": scale * jax.random.normal(ks[7], (1, NUM_CLASSES), jnp.float32),
    }


def reference_forward(x_nchw, params):
    """Pure-JAX reference of the UNFOLDED head (backbones -> concat -> fc1 -> relu -> fc2)."""
    B = x_nchw.shape[0]
    pooled = jnp.mean(x_nchw.reshape(B, 3, -1), axis=-1)
    res_feat = pooled @ params["w_res"] + params["b_res"]
    inc_feat = pooled @ params["w_inc"] + params["b_inc"]
    combined = jnp.concatenate([res_feat, inc_feat], axis=1)
    h = jnp.maximum(combined @ params["w1"] + params["b1"], 0.0)
    return h @ params["w2"] + params["b2"]


if __name__ == "__main__":
    key = jax.random.PRNGKey(0)
    k_params, k_x = jax.random.split(key)
    params = init_params(k_params)

    # small image batch: [B, C, H, W] = [2, 3, 32, 32]
    x = jax.random.normal(k_x, (2, 3, 32, 32), jnp.float32)

    out = combined_model_forward(x, params)
    out = jax.block_until_ready(out)

    ref = reference_forward(x, params)
    assert out.shape == (2, NUM_CLASSES)
    assert jnp.allclose(out, ref, atol=1e-4, rtol=1e-4)

    print("KERNEL_OK")
</pallas_src>

<mosaic_0001>
module attributes {stable_mosaic.version = 11 : i64} {
  func.func @combined_head_kernel(%arg0: i32, %arg1: memref<8x3072xf32, #tpu.memory_space<vmem>>, %arg2: memref<3x512xf32, #tpu.memory_space<vmem>>, %arg3: memref<1x512xf32, #tpu.memory_space<vmem>>, %arg4: memref<512x128xf32, #tpu.memory_space<vmem>>, %arg5: memref<1x128xf32, #tpu.memory_space<vmem>>, %arg6: memref<8x128xf32, #tpu.memory_space<vmem>>) attributes {dimension_semantics = [#tpu.dimension_semantics<parallel>], iteration_bounds = array<i64: 1>, scalar_prefetch = 0 : i64, scratch_operands = 0 : i64, tpu.core_type = #tpu.core_type<tc>, window_params = [{transform_indices = @transform_0, window_bounds = array<i64: 8, 3072>}, {pipeline_mode = #tpu.pipeline_mode<synchronous>, transform_indices = @transform_1, window_bounds = array<i64: 3, 512>}, {pipeline_mode = #tpu.pipeline_mode<synchronous>, transform_indices = @transform_2, window_bounds = array<i64: 1, 512>}, {pipeline_mode = #tpu.pipeline_mode<synchronous>, transform_indices = @transform_3, window_bounds = array<i64: 512, 128>}, {pipeline_mode = #tpu.pipeline_mode<synchronous>, transform_indices = @transform_4, window_bounds = array<i64: 1, 128>}, {transform_indices = @transform_5, window_bounds = array<i64: 8, 128>}]} {
    %c0 = arith.constant 0 : index
    %c0_0 = arith.constant 0 : index
    %0 = vector.load %arg1[%c0, %c0_0] : memref<8x3072xf32, #tpu.memory_space<vmem>>, vector<8x1024xf32>
    %cst = arith.constant dense<0.000000e+00> : vector<8xf32>
    %1 = vector.multi_reduction <add>, %0, %cst [1] : vector<8x1024xf32> to vector<8xf32>
    %2 = vector.shape_cast %1 : vector<8xf32> to vector<8x1xf32>
    %c0_1 = arith.constant 0 : index
    %c1024 = arith.constant 1024 : index
    %3 = vector.load %arg1[%c0_1, %c1024] : memref<8x3072xf32, #tpu.memory_space<vmem>>, vector<8x1024xf32>
    %cst_2 = arith.constant dense<0.000000e+00> : vector<8xf32>
    %4 = vector.multi_reduction <add>, %3, %cst_2 [1] : vector<8x1024xf32> to vector<8xf32>
    %5 = vector.shape_cast %4 : vector<8xf32> to vector<8x1xf32>
    %c0_3 = arith.constant 0 : index
    %c2048 = arith.constant 2048 : index
    %6 = vector.load %arg1[%c0_3, %c2048] : memref<8x3072xf32, #tpu.memory_space<vmem>>, vector<8x1024xf32>
    %cst_4 = arith.constant dense<0.000000e+00> : vector<8xf32>
    %7 = vector.multi_reduction <add>, %6, %cst_4 [1] : vector<8x1024xf32> to vector<8xf32>
    %8 = vector.shape_cast %7 : vector<8xf32> to vector<8x1xf32>
    %c0_5 = arith.constant 0 : index
    %c0_6 = arith.constant 0 : index
    %9 = vector.load %arg2[%c0_5, %c0_6] : memref<3x512xf32, #tpu.memory_space<vmem>>, vector<3x512xf32>
    %c0_7 = arith.constant 0 : index
    %c0_8 = arith.constant 0 : index
    %10 = vector.load %arg3[%c0_7, %c0_8] : memref<1x512xf32, #tpu.memory_space<vmem>>, vector<1x512xf32>
    %11 = vector.extract_strided_slice %9 {offsets = [0, 0], sizes = [1, 512], strides = [1, 1]} : vector<3x512xf32> to vector<1x512xf32>
    %12 = vector.broadcast %2 : vector<8x1xf32> to vector<8x512xf32>
    %13 = vector.broadcast %11 : vector<1x512xf32> to vector<8x512xf32>
    %14 = arith.mulf %12, %13 : vector<8x512xf32>
    %15 = vector.broadcast %10 : vector<1x512xf32> to vector<8x512xf32>
    %16 = arith.addf %15, %14 : vector<8x512xf32>
    %17 = vector.extract_strided_slice %9 {offsets = [1, 0], sizes = [1, 512], strides = [1, 1]} : vector<3x512xf32> to vector<1x512xf32>
    %18 = vector.broadcast %5 : vector<8x1xf32> to vector<8x512xf32>
    %19 = vector.broadcast %17 : vector<1x512xf32> to vector<8x512xf32>
    %20 = arith.mulf %18, %19 : vector<8x512xf32>
    %21 = arith.addf %16, %20 : vector<8x512xf32>
    %22 = vector.extract_strided_slice %9 {offsets = [2, 0], sizes = [1, 512], strides = [1, 1]} : vector<3x512xf32> to vector<1x512xf32>
    %23 = vector.broadcast %8 : vector<8x1xf32> to vector<8x512xf32>
    %24 = vector.broadcast %22 : vector<1x512xf32> to vector<8x512xf32>
    %25 = arith.mulf %23, %24 : vector<8x512xf32>
    %26 = arith.addf %21, %25 : vector<8x512xf32>
    %cst_9 = arith.constant 0.000000e+00 : f32
    %27 = vector.broadcast %cst_9 : f32 to vector<8x512xf32>
    %28 = arith.maximumf %26, %27 : vector<8x512xf32>
    %c0_10 = arith.constant 0 : index
    %c0_11 = arith.constant 0 : index
    %29 = vector.load %arg4[%c0_10, %c0_11] : memref<512x128xf32, #tpu.memory_space<vmem>>, vector<512x128xf32>
    %cst_12 = arith.constant dense<0.000000e+00> : vector<8x128xf32>
    %30 = tpu.matmul %28, %29, %cst_12 {dimension_numbers = #tpu.dot_dimension_numbers<[1], [0], [0], [1], [0, 0, 1, 1], [], []>} : vector<8x512xf32>, vector<512x128xf32>, vector<8x128xf32> -> vector<8x128xf32>
    %c0_13 = arith.constant 0 : index
    %c0_14 = arith.constant 0 : index
    %31 = vector.load %arg5[%c0_13, %c0_14] : memref<1x128xf32, #tpu.memory_space<vmem>>, vector<1x128xf32>
    %32 = vector.broadcast %31 : vector<1x128xf32> to vector<8x128xf32>
    %33 = arith.addf %30, %32 : vector<8x128xf32>
    %c0_15 = arith.constant 0 : index
    %c0_16 = arith.constant 0 : index
    %34 = vector.load %arg6[%c0_15, %c0_16] : memref<8x128xf32, #tpu.memory_space<vmem>>, vector<8x128xf32>
    tpu.vector_store %arg6[%c0_15, %c0_16], %33 {strides = array<i32>} : memref<8x128xf32, #tpu.memory_space<vmem>>, vector<8x128xf32>,
    return
  }
  func.func @transform_0(%arg0: i32) -> (i32, i32) {
    %c0_i32 = arith.constant 0 : i32
    %c0_i32_0 = arith.constant 0 : i32
    return %arg0, %c0_i32 : i32, i32
  }
  func.func @transform_1(%arg0: i32) -> (i32, i32) {
    %c0_i32 = arith.constant 0 : i32
    %c0_i32_0 = arith.constant 0 : i32
    %c0_i32_1 = arith.constant 0 : i32
    return %c0_i32, %c0_i32_0 : i32, i32
  }
  func.func @transform_2(%arg0: i32) -> (i32, i32) {
    %c0_i32 = arith.constant 0 : i32
    %c0_i32_0 = arith.constant 0 : i32
    %c0_i32_1 = arith.constant 0 : i32
    return %c0_i32, %c0_i32_0 : i32, i32
  }
  func.func @transform_3(%arg0: i32) -> (i32, i32) {
    %c0_i32 = arith.constant 0 : i32
    %c0_i32_0 = arith.constant 0 : i32
    %c0_i32_1 = arith.constant 0 : i32
    return %c0_i32, %c0_i32_0 : i32, i32
  }
  func.func @transform_4(%arg0: i32) -> (i32, i32) {
    %c0_i32 = arith.constant 0 : i32
    %c0_i32_0 = arith.constant 0 : i32
    %c0_i32_1 = arith.constant 0 : i32
    return %c0_i32, %c0_i32_0 : i32, i32
  }
  func.func @transform_5(%arg0: i32) -> (i32, i32) {
    %c0_i32 = arith.constant 0 : i32
    %c0_i32_0 = arith.constant 0 : i32
    return %arg0, %c0_i32 : i32, i32
  }
}

</mosaic_0001>

<llo_original>
// kernel: tpu_custom_call.1
$region0: #{tpu_custom_call.1}
  #allocation0 [shape = 'u32[]', space=smem, size = 0x4, offset = 0x4, fixed_abs, tag = 'smem constant byte address 0x4 - core index']
  #allocation1 [shape = 'u32[144,128]{1,0:T(1,128)}', space=vmem, size = 0x12000, scoped, tag = 'internal scratch']
  %s0 = inlined_call_operand.hbm [shape: f32[8,3072], index: 0, kind: input, shape index: {}]
  %s1 = inlined_call_operand.hbm [shape: f32[3,512], index: 1, kind: input, shape index: {}]
  %s2 = inlined_call_operand.vmem [shape: f32[1,512], index: 2, kind: input, shape index: {}]
  %s3 = inlined_call_operand.hbm [shape: f32[512,128], index: 3, kind: input, shape index: {}]
  %s4 = inlined_call_operand.vmem [shape: f32[1,128], index: 4, kind: input, shape index: {}]
  %s5 = inlined_call_operand.hbm [shape: f32[8,128], index: 5, kind: output, shape index: {}]
  %s6 = sld [smem:[#allocation0]]
  $region42: #{tpu_custom_call.1} parent=0
    _
  %s8 = ssub.s32 1, %s6
  %s9 = scalar_select 0, %s8, %s6
  $region1: #{tpu_custom_call.1} parent=0
    #allocation2 [shape = 'u8[98304]{0}', space=vmem, size = 0x18000, scoped, tag = 'input window, operand 0, single buffered']
    #allocation3 [shape = 's32[1]{0}', space=sflag, size = 0x4, scoped, tag = 'scoped memory for tpu_custom_call.1']
    #allocation4 [shape = 's32[1]{0}', space=sflag, size = 0x4, scoped, tag = 'scoped memory for tpu_custom_call.1']
    #allocation5 [shape = 'u8[8192]{0}', space=vmem, size = 0x2000, scoped, tag = 'input window, operand 1, single buffered']
    #allocation6 [shape = 's32[1]{0}', space=sflag, size = 0x4, scoped, tag = 'scoped memory for tpu_custom_call.1']
    #allocation7 [shape = 'u8[262144]{0}', space=vmem, size = 0x40000, scoped, tag = 'input window, operand 3, single buffered']
    #allocation8 [shape = 'u8[4096]{0}', space=vmem, size = 0x1000, scoped, tag = 'output window, operand 0, single buffered']
    %10 = vsyncpa [#allocation3], 0
    %11 = vsyncpa [#allocation6], 0
    %12 = vsyncpa [#allocation4], 0
    // Predicated region
    $region2: #{tpu_custom_call.1} parent=1 // pred_check
      _
    $region3: #{tpu_custom_call.1} parent=1 // pred_check_branch
      %14 = sbr.rel (0) target = $region5
    $region4: #{tpu_custom_call.1} parent=1 // pred_region
      %s16 = ssub.s32 3072, 3072
      %17 = vsyncadd [#allocation3], %s16
      %s19 = sshll.u32 [#allocation2], 4
      %s20 = int_to_ptr.vmem [resolvable:$true] %s19
      %22 = dma.hbm_to_vmem [thread:$0]  %s0, 3072, %s20, [#allocation3]
    $region5: #{tpu_custom_call.1} parent=1 // pred_fallthru
      _
    // Predicated region
    $region6: #{tpu_custom_call.1} parent=1 // pred_check
      _
    $region7: #{tpu_custom_call.1} parent=1 // pred_check_branch
      %24 = sbr.rel (0) target = $region9
    $region8: #{tpu_custom_call.1} parent=1 // pred_region
      %s26 = ssub.s32 256, 256
      %27 = vsyncadd [#allocation6], %s26
      %s29 = sshll.u32 [#allocation5], 4
      %s30 = int_to_ptr.vmem [resolvable:$true] %s29
      %32 = dma.hbm_to_vmem [thread:$0]  %s1, 256, %s30, [#allocation6]
    $region9: #{tpu_custom_call.1} parent=1 // pred_fallthru
      _
    // Predicated region
    $region10: #{tpu_custom_call.1} parent=1 // pred_check
      _
    $region11: #{tpu_custom_call.1} parent=1 // pred_check_branch
      %34 = sbr.rel (0) target = $region13
    $region12: #{tpu_custom_call.1} parent=1 // pred_region
      _
    $region13: #{tpu_custom_call.1} parent=1 // pred_fallthru
      _
    // Predicated region
    $region14: #{tpu_custom_call.1} parent=1 // pred_check
      _
    $region15: #{tpu_custom_call.1} parent=1 // pred_check_branch
      %36 = sbr.rel (0) target = $region17
    $region16: #{tpu_custom_call.1} parent=1 // pred_region
      %s38 = ssub.s32 8192, 8192
      %39 = vsyncadd [#allocation6], %s38
      %s40 = sshll.u32 [#allocation7], 4
      %s41 = int_to_ptr.vmem [resolvable:$true] %s40
      %46 = dma.hbm_to_vmem [thread:$0]  %s3, 8192, %s41, [#allocation6], 128, 128, 8
    $region17: #{tpu_custom_call.1} parent=1 // pred_fallthru
      _
    // Predicated region
    $region18: #{tpu_custom_call.1} parent=1 // pred_check
      _
    $region19: #{tpu_custom_call.1} parent=1 // pred_check_branch
      %48 = sbr.rel (0) target = $region21
    $region20: #{tpu_custom_call.1} parent=1 // pred_region
      _
    $region21: #{tpu_custom_call.1} parent=1 // pred_fallthru
      _
    // Predicated region
    $region22: #{tpu_custom_call.1} parent=1 // pred_check
      _
    $region23: #{tpu_custom_call.1} parent=1 // pred_check_branch
      %50 = sbr.rel (0) target = $region25
    $region24: #{tpu_custom_call.1} parent=1 // pred_region
      %51 = dma.done [#allocation3], 3072
    $region25: #{tpu_custom_call.1} parent=1 // pred_fallthru
      _
    // Predicated region
    $region26: #{tpu_custom_call.1} parent=1 // pred_check
      _
    $region27: #{tpu_custom_call.1} parent=1 // pred_check_branch
      %53 = sbr.rel (0) target = $region29
    $region28: #{tpu_custom_call.1} parent=1 // pred_region
      %54 = dma.done [#allocation6], 256
    $region29: #{tpu_custom_call.1} parent=1 // pred_fallthru
      _
    // Predicated region
    $region30: #{tpu_custom_call.1} parent=1 // pred_check
      _
    $region31: #{tpu_custom_call.1} parent=1 // pred_check_branch
      %56 = sbr.rel (0) target = $region33
    $region32: #{tpu_custom_call.1} parent=1 // pred_region
      %57 = dma.done [#allocation6], 8192
    $region33: #{tpu_custom_call.1} parent=1 // pred_fallthru
      _
    %v58 = vld [vmem:[#allocation2] sm:$0xff]
    %v59 = vld [vmem:[#allocation2 + $0x8] sm:$0xff]
    %v60 = vld [vmem:[#allocation2 + $0x10] sm:$0xff]
    %v61 = vld [vmem:[#allocation2 + $0x18] sm:$0xff]
    %v62 = vld [vmem:[#allocation2 + $0x20] sm:$0xff]
    %v63 = vld [vmem:[#allocation2 + $0x28] sm:$0xff]
    %v64 = vld [vmem:[#allocation2 + $0x30] sm:$0xff]
    %v65 = vld [vmem:[#allocation2 + $0x38] sm:$0xff]
    %v66 = vadd.f32 %v58, %v59
    %v67 = vadd.f32 %v66, %v60
    %v68 = vadd.f32 %v67, %v61
    %v69 = vadd.f32 %v68, %v62
    %v70 = vadd.f32 %v69, %v63
    %v71 = vadd.f32 %v70, %v64
    %v72 = vadd.f32 %v71, %v65
    %73 = vadd.xlane.f32.xlu0 %v72
    %v74 = vpop.xlane.xlu0 %73
    %v75 = vld [vmem:[#allocation2 + $0x40] sm:$0xff]
    %v76 = vld [vmem:[#allocation2 + $0x48] sm:$0xff]
    %v77 = vld [vmem:[#allocation2 + $0x50] sm:$0xff]
    %v78 = vld [vmem:[#allocation2 + $0x58] sm:$0xff]
    %v79 = vld [vmem:[#allocation2 + $0x60] sm:$0xff]
    %v80 = vld [vmem:[#allocation2 + $0x68] sm:$0xff]
    %v81 = vld [vmem:[#allocation2 + $0x70] sm:$0xff]
    %v82 = vld [vmem:[#allocation2 + $0x78] sm:$0xff]
    %v83 = vadd.f32 %v75, %v76
    %v84 = vadd.f32 %v83, %v77
    %v85 = vadd.f32 %v84, %v78
    %v86 = vadd.f32 %v85, %v79
    %v87 = vadd.f32 %v86, %v80
    %v88 = vadd.f32 %v87, %v81
    %v89 = vadd.f32 %v88, %v82
    %90 = vadd.xlane.f32.xlu0 %v89
    %v91 = vpop.xlane.xlu0 %90
    %v92 = vld [vmem:[#allocation2 + $0x80] sm:$0xff]
    %v93 = vld [vmem:[#allocation2 + $0x88] sm:$0xff]
    %v94 = vld [vmem:[#allocation2 + $0x90] sm:$0xff]
    %v95 = vld [vmem:[#allocation2 + $0x98] sm:$0xff]
    %v96 = vld [vmem:[#allocation2 + $0xa0] sm:$0xff]
    %v97 = vld [vmem:[#allocation2 + $0xa8] sm:$0xff]
    %v98 = vld [vmem:[#allocation2 + $0xb0] sm:$0xff]
    %v99 = vld [vmem:[#allocation2 + $0xb8] sm:$0xff]
    %v100 = vadd.f32 %v92, %v93
    %v101 = vadd.f32 %v100, %v94
    %v102 = vadd.f32 %v101, %v95
    %v103 = vadd.f32 %v102, %v96
    %v104 = vadd.f32 %v103, %v97
    %v105 = vadd.f32 %v104, %v98
    %v106 = vadd.f32 %v105, %v99
    %107 = vadd.xlane.f32.xlu0 %v106
    %v108 = vpop.xlane.xlu0 %107
    %v109 = vld [vmem:[#allocation5] sm:$0x77]
    %v110 = vld [vmem:[#allocation5 + $0x8] sm:$0x77]
    %v111 = vld [vmem:[%s2] sm:$0xf]
    %v114 = vlaneseq
    %v115 = vshrl.u32 %v114, 7
    %v116 = vsub.s32 0, %v115
    %v117 = vrot.slane %v109, %v116
    %v118 = vlaneseq
    %v119 = vshrl.u32 %v118, 7
    %v120 = vsub.s32 4, %v119
    %v121 = vrot.slane %v109, %v120
    %v122 = vlaneseq
    %v123 = vshrl.u32 %v122, 7
    %v124 = vsub.s32 0, %v123
    %v125 = vrot.slane %v110, %v124
    %v126 = vlaneseq
    %v127 = vshrl.u32 %v126, 7
    %v128 = vsub.s32 4, %v127
    %v129 = vrot.slane %v110, %v128
    %v134 = vlaneseq
    %v135 = vshrl.u32 %v134, 7
    %v136 = vsub.s32 0, %v135
    %v137 = vrot.slane %v117, %v136
    %v138 = vlaneseq
    %v139 = vshrl.u32 %v138, 7
    %v140 = vsub.s32 0, %v139
    %v141 = vrot.slane %v121, %v140
    %v142 = vlaneseq
    %v143 = vshrl.u32 %v142, 7
    %v144 = vsub.s32 0, %v143
    %v145 = vrot.slane %v125, %v144
    %v146 = vlaneseq
    %v147 = vshrl.u32 %v146, 7
    %v148 = vsub.s32 0, %v147
    %v149 = vrot.slane %v129, %v148
    %v150 = vmul.f32 %v74, %v137
    %v151 = vmul.f32 %v74, %v141
    %v152 = vmul.f32 %v74, %v145
    %v153 = vmul.f32 %v74, %v149
    %v155 = vlaneseq
    %v156 = vshrl.u32 %v155, 7
    %v157 = vsub.s32 0, %v156
    %v158 = vrot.slane %v111, %v157
    %v159 = vlaneseq
    %v160 = vshrl.u32 %v159, 7
    %v161 = vsub.s32 1, %v160
    %v162 = vrot.slane %v111, %v161
    %v163 = vlaneseq
    %v164 = vshrl.u32 %v163, 7
    %v165 = vsub.s32 2, %v164
    %v166 = vrot.slane %v111, %v165
    %v167 = vlaneseq
    %v168 = vshrl.u32 %v167, 7
    %v169 = vsub.s32 3, %v168
    %v170 = vrot.slane %v111, %v169
    %v175 = vadd.f32 %v158, %v150
    %v176 = vadd.f32 %v162, %v151
    %v177 = vadd.f32 %v166, %v152
    %v178 = vadd.f32 %v170, %v153
    %v179 = vlaneseq
    %v180 = vshrl.u32 %v179, 7
    %v181 = vsub.s32 1, %v180
    %v182 = vrot.slane %v109, %v181
    %v183 = vlaneseq
    %v184 = vshrl.u32 %v183, 7
    %v185 = vsub.s32 5, %v184
    %v186 = vrot.slane %v109, %v185
    %v187 = vlaneseq
    %v188 = vshrl.u32 %v187, 7
    %v189 = vsub.s32 1, %v188
    %v190 = vrot.slane %v110, %v189
    %v191 = vlaneseq
    %v192 = vshrl.u32 %v191, 7
    %v193 = vsub.s32 5, %v192
    %v194 = vrot.slane %v110, %v193
    %v199 = vlaneseq
    %v200 = vshrl.u32 %v199, 7
    %v201 = vsub.s32 1, %v200
    %v202 = vrot.slane %v182, %v201
    %v203 = vlaneseq
    %v204 = vshrl.u32 %v203, 7
    %v205 = vsub.s32 1, %v204
    %v206 = vrot.slane %v186, %v205
    %v207 = vlaneseq
    %v208 = vshrl.u32 %v207, 7
    %v209 = vsub.s32 1, %v208
    %v210 = vrot.slane %v190, %v209
    %v211 = vlaneseq
    %v212 = vshrl.u32 %v211, 7
    %v213 = vsub.s32 1, %v212
    %v214 = vrot.slane %v194, %v213
    %v215 = vmul.f32 %v91, %v202
    %v216 = vmul.f32 %v91, %v206
    %v217 = vmul.f32 %v91, %v210
    %v218 = vmul.f32 %v91, %v214
    %v219 = vadd.f32 %v175, %v215
    %v220 = vadd.f32 %v176, %v216
    %v221 = vadd.f32 %v177, %v217
    %v222 = vadd.f32 %v178, %v218
    %v223 = vlaneseq
    %v224 = vshrl.u32 %v223, 7
    %v225 = vsub.s32 2, %v224
    %v226 = vrot.slane %v109, %v225
    %v227 = vlaneseq
    %v228 = vshrl.u32 %v227, 7
    %v229 = vsub.s32 6, %v228
    %v230 = vrot.slane %v109, %v229
    %v231 = vlaneseq
    %v232 = vshrl.u32 %v231, 7
    %v233 = vsub.s32 2, %v232
    %v234 = vrot.slane %v110, %v233
    %v235 = vlaneseq
    %v236 = vshrl.u32 %v235, 7
    %v237 = vsub.s32 6, %v236
    %v238 = vrot.slane %v110, %v237
    %v243 = vlaneseq
    %v244 = vshrl.u32 %v243, 7
    %v245 = vsub.s32 2, %v244
    %v246 = vrot.slane %v226, %v245
    %v247 = vlaneseq
    %v248 = vshrl.u32 %v247, 7
    %v249 = vsub.s32 2, %v248
    %v250 = vrot.slane %v230, %v249
    %v251 = vlaneseq
    %v252 = vshrl.u32 %v251, 7
    %v253 = vsub.s32 2, %v252
    %v254 = vrot.slane %v234, %v253
    %v255 = vlaneseq
    %v256 = vshrl.u32 %v255, 7
    %v257 = vsub.s32 2, %v256
    %v258 = vrot.slane %v238, %v257
    %v259 = vmul.f32 %v108, %v246
    %v260 = vmul.f32 %v108, %v250
    %v261 = vmul.f32 %v108, %v254
    %v262 = vmul.f32 %v108, %v258
    %v263 = vadd.f32 %v219, %v259
    %v264 = vadd.f32 %v220, %v260
    %v265 = vadd.f32 %v221, %v261
    %v266 = vadd.f32 %v222, %v262
    %v267 = vmax.f32 %v263, 0.0
    %v268 = vmax.f32 %v264, 0.0
    %v269 = vmax.f32 %v265, 0.0
    %v270 = vmax.f32 %v266, 0.0
    %v271 = vld [vmem:[#allocation7] sm:$0xff]
    %v272 = vld [vmem:[#allocation7 + $0x8] sm:$0xff]
    %v273 = vld [vmem:[#allocation7 + $0x10] sm:$0xff]
    %v274 = vld [vmem:[#allocation7 + $0x18] sm:$0xff]
    %v275 = vld [vmem:[#allocation7 + $0x20] sm:$0xff]
    %v276 = vld [vmem:[#allocation7 + $0x28] sm:$0xff]
    %v277 = vld [vmem:[#allocation7 + $0x30] sm:$0xff]
    %v278 = vld [vmem:[#allocation7 + $0x38] sm:$0xff]
    %v279 = vld [vmem:[#allocation7 + $0x40] sm:$0xff]
    %v280 = vld [vmem:[#allocation7 + $0x48] sm:$0xff]
    %v281 = vld [vmem:[#allocation7 + $0x50] sm:$0xff]
    %v282 = vld [vmem:[#allocation7 + $0x58] sm:$0xff]
    %v283 = vld [vmem:[#allocation7 + $0x60] sm:$0xff]
    %v284 = vld [vmem:[#allocation7 + $0x68] sm:$0xff]
    %v285 = vld [vmem:[#allocation7 + $0x70] sm:$0xff]
    %v286 = vld [vmem:[#allocation7 + $0x78] sm:$0xff]
    %v287 = vld [vmem:[#allocation7 + $0x80] sm:$0xff]
    %v288 = vld [vmem:[#allocation7 + $0x88] sm:$0xff]
    %v289 = vld [vmem:[#allocation7 + $0x90] sm:$0xff]
    %v290 = vld [vmem:[#allocation7 + $0x98] sm:$0xff]
    %v291 = vld [vmem:[#allocation7 + $0xa0] sm:$0xff]
    %v292 = vld [vmem:[#allocation7 + $0xa8] sm:$0xff]
    %v293 = vld [vmem:[#allocation7 + $0xb0] sm:$0xff]
    %v294 = vld [vmem:[#allocation7 + $0xb8] sm:$0xff]
    %v295 = vld [vmem:[#allocation7 + $0xc0] sm:$0xff]
    %v296 = vld [vmem:[#allocation7 + $0xc8] sm:$0xff]
    %v297 = vld [vmem:[#allocation7 + $0xd0] sm:$0xff]
    %v298 = vld [vmem:[#allocation7 + $0xd8] sm:$0xff]
    %v299 = vld [vmem:[#allocation7 + $0xe0] sm:$0xff]
    %v300 = vld [vmem:[#allocation7 + $0xe8] sm:$0xff]
    %v301 = vld [vmem:[#allocation7 + $0xf0] sm:$0xff]
    %v302 = vld [vmem:[#allocation7 + $0xf8] sm:$0xff]
    %v303 = vld [vmem:[#allocation7 + $0x100] sm:$0xff]
    %v304 = vld [vmem:[#allocation7 + $0x108] sm:$0xff]
    %v305 = vld [vmem:[#allocation7 + $0x110] sm:$0xff]
    %v306 = vld [vmem:[#allocation7 + $0x118] sm:$0xff]
    %v307 = vld [vmem:[#allocation7 + $0x120] sm:$0xff]
    %v308 = vld [vmem:[#allocation7 + $0x128] sm:$0xff]
    %v309 = vld [vmem:[#allocation7 + $0x130] sm:$0xff]
    %v310 = vld [vmem:[#allocation7 + $0x138] sm:$0xff]
    %v311 = vld [vmem:[#allocation7 + $0x140] sm:$0xff]
    %v312 = vld [vmem:[#allocation7 + $0x148] sm:$0xff]
    %v313 = vld [vmem:[#allocation7 + $0x150] sm:$0xff]
    %v314 = vld [vmem:[#allocation7 + $0x158] sm:$0xff]
    %v315 = vld [vmem:[#allocation7 + $0x160] sm:$0xff]
    %v316 = vld [vmem:[#allocation7 + $0x168] sm:$0xff]
    %v317 = vld [vmem:[#allocation7 + $0x170] sm:$0xff]
    %v318 = vld [vmem:[#allocation7 + $0x178] sm:$0xff]
    %v319 = vld [vmem:[#allocation7 + $0x180] sm:$0xff]
    %v320 = vld [vmem:[#allocation7 + $0x188] sm:$0xff]
    %v321 = vld [vmem:[#allocation7 + $0x190] sm:$0xff]
    %v322 = vld [vmem:[#allocation7 + $0x198] sm:$0xff]
    %v323 = vld [vmem:[#allocation7 + $0x1a0] sm:$0xff]
    %v324 = vld [vmem:[#allocation7 + $0x1a8] sm:$0xff]
    %v325 = vld [vmem:[#allocation7 + $0x1b0] sm:$0xff]
    %v326 = vld [vmem:[#allocation7 + $0x1b8] sm:$0xff]
    %v327 = vld [vmem:[#allocation7 + $0x1c0] sm:$0xff]
    %v328 = vld [vmem:[#allocation7 + $0x1c8] sm:$0xff]
    %v329 = vld [vmem:[#allocation7 + $0x1d0] sm:$0xff]
    %v330 = vld [vmem:[#allocation7 + $0x1d8] sm:$0xff]
    %v331 = vld [vmem:[#allocation7 + $0x1e0] sm:$0xff]
    %v332 = vld [vmem:[#allocation7 + $0x1e8] sm:$0xff]
    %v333 = vld [vmem:[#allocation7 + $0x1f0] sm:$0xff]
    %v334 = vld [vmem:[#allocation7 + $0x1f8] sm:$0xff]
    %v335 = vld [vmem:[%s4] sm:$0x1]
    %v337 = vlaneseq
    %v338 = vshrl.u32 %v337, 7
    %v339 = vsub.s32 0, %v338
    %v340 = vrot.slane %v335, %v339
    %342 = vmatprep.subr.mxu0 0.0
    %343 = vmatpush1.msra.mxu0 %v271
    %344 = vmatprep.subr.mxu0 0.0
    %345 = vmatpush1.msra.mxu0 %v272
    %346 = vmatprep.subr.mxu0 0.0
    %347 = vmatpush1.msra.mxu0 %v273
    %348 = vmatprep.subr.mxu0 0.0
    %349 = vmatpush1.msra.mxu0 %v274
    %350 = vmatprep.subr.mxu0 0.0
    %351 = vmatpush1.msra.mxu0 %v275
    %352 = vmatprep.subr.mxu0 0.0
    %353 = vmatpush1.msra.mxu0 %v276
    %354 = vmatprep.subr.mxu0 0.0
    %355 = vmatpush1.msra.mxu0 %v277
    %356 = vmatprep.subr.mxu0 0.0
    %357 = vmatpush1.msra.mxu0 %v278
    %358 = vmatprep.subr.mxu0 0.0
    %359 = vmatpush1.msra.mxu0 %v279
    %360 = vmatprep.subr.mxu0 0.0
    %361 = vmatpush1.msra.mxu0 %v280
    %362 = vmatprep.subr.mxu0 0.0
    %363 = vmatpush1.msra.mxu0 %v281
    %364 = vmatprep.subr.mxu0 0.0
    %365 = vmatpush1.msra.mxu0 %v282
    %366 = vmatprep.subr.mxu0 0.0
    %367 = vmatpush1.msra.mxu0 %v283
    %368 = vmatprep.subr.mxu0 0.0
    %369 = vmatpush1.msra.mxu0 %v284
    %370 = vmatprep.subr.mxu0 0.0
    %371 = vmatpush1.msra.mxu0 %v285
    %372 = vmatprep.subr.mxu0 0.0
    %373 = vmatpush1.msra.mxu0 %v286
    %374 = vmatprep.subr.mxu0 0.0
    %375 = vmatpush1.msra.mxu0 %v287
    %376 = vmatprep.subr.mxu0 0.0
    %377 = vmatpush1.msra.mxu0 %v288
    %378 = vmatprep.subr.mxu0 0.0
    %379 = vmatpush1.msra.mxu0 %v289
    %380 = vmatprep.subr.mxu0 0.0
    %381 = vmatpush1.msra.mxu0 %v290
    %382 = vmatprep.subr.mxu0 0.0
    %383 = vmatpush1.msra.mxu0 %v291
    %384 = vmatprep.subr.mxu0 0.0
    %385 = vmatpush1.msra.mxu0 %v292
    %386 = vmatprep.subr.mxu0 0.0
    %387 = vmatpush1.msra.mxu0 %v293
    %388 = vmatprep.subr.mxu0 0.0
    %389 = vmatpush1.msra.mxu0 %v294
    %390 = vmatprep.subr.mxu0 0.0
    %391 = vmatpush1.msra.mxu0 %v295
    %392 = vmatprep.subr.mxu0 0.0
    %393 = vmatpush1.msra.mxu0 %v296
    %394 = vmatprep.subr.mxu0 0.0
    %395 = vmatpush1.msra.mxu0 %v297
    %396 = vmatprep.subr.mxu0 0.0
    %397 = vmatpush1.msra.mxu0 %v298
    %398 = vmatprep.subr.mxu0 0.0
    %399 = vmatpush1.msra.mxu0 %v299
    %400 = vmatprep.subr.mxu0 0.0
    %401 = vmatpush1.msra.mxu0 %v300
    %402 = vmatprep.subr.mxu0 0.0
    %403 = vmatpush1.msra.mxu0 %v301
    %404 = vmatprep.subr.mxu0 0.0
    %405 = vmatpush1.msra.mxu0 %v302
    %406 = vmatprep.mubr.f32.mxu0 %v268
    %407 = vmatmul.mubr.f32.gmra.mrb[0].mxu0 %v267
    %v408 = vpop.f32.mrb[0].mxu0
    %v409 = vadd.f32 %v340, %v408
    %v410 = vpop.f32.mrb[0].mxu0
    %411 = vdwg.mxu0
    %412 = vmatprep.subr.mxu0 0.0
    %413 = vmatpush1.msra.mxu0 %v303
    %414 = vmatprep.subr.mxu0 0.0
    %415 = vmatpush1.msra.mxu0 %v304
    %416 = vmatprep.subr.mxu0 0.0
    %417 = vmatpush1.msra.mxu0 %v305
    %418 = vmatprep.subr.mxu0 0.0
    %419 = vmatpush1.msra.mxu0 %v306
    %420 = vmatprep.subr.mxu0 0.0
    %421 = vmatpush1.msra.mxu0 %v307
    %422 = vmatprep.subr.mxu0 0.0
    %423 = vmatpush1.msra.mxu0 %v308
    %424 = vmatprep.subr.mxu0 0.0
    %425 = vmatpush1.msra.mxu0 %v309
    %426 = vmatprep.subr.mxu0 0.0
    %427 = vmatpush1.msra.mxu0 %v310
    %428 = vmatprep.subr.mxu0 0.0
    %429 = vmatpush1.msra.mxu0 %v311
    %430 = vmatprep.subr.mxu0 0.0
    %431 = vmatpush1.msra.mxu0 %v312
    %432 = vmatprep.subr.mxu0 0.0
    %433 = vmatpush1.msra.mxu0 %v313
    %434 = vmatprep.subr.mxu0 0.0
    %435 = vmatpush1.msra.mxu0 %v314
    %436 = vmatprep.subr.mxu0 0.0
    %437 = vmatpush1.msra.mxu0 %v315
    %438 = vmatprep.subr.mxu0 0.0
    %439 = vmatpush1.msra.mxu0 %v316
    %440 = vmatprep.subr.mxu0 0.0
    %441 = vmatpush1.msra.mxu0 %v317
    %442 = vmatprep.subr.mxu0 0.0
    %443 = vmatpush1.msra.mxu0 %v318
    %444 = vmatprep.subr.mxu0 0.0
    %445 = vmatpush1.msra.mxu0 %v319
    %446 = vmatprep.subr.mxu0 0.0
    %447 = vmatpush1.msra.mxu0 %v320
    %448 = vmatprep.subr.mxu0 0.0
    %449 = vmatpush1.msra.mxu0 %v321
    %450 = vmatprep.subr.mxu0 0.0
    %451 = vmatpush1.msra.mxu0 %v322
    %452 = vmatprep.subr.mxu0 0.0
    %453 = vmatpush1.msra.mxu0 %v323
    %454 = vmatprep.subr.mxu0 0.0
    %455 = vmatpush1.msra.mxu0 %v324
    %456 = vmatprep.subr.mxu0 0.0
    %457 = vmatpush1.msra.mxu0 %v325
    %458 = vmatprep.subr.mxu0 0.0
    %459 = vmatpush1.msra.mxu0 %v326
    %460 = vmatprep.subr.mxu0 0.0
    %461 = vmatpush1.msra.mxu0 %v327
    %462 = vmatprep.subr.mxu0 0.0
    %463 = vmatpush1.msra.mxu0 %v328
    %464 = vmatprep.subr.mxu0 0.0
    %465 = vmatpush1.msra.mxu0 %v329
    %466 = vmatprep.subr.mxu0 0.0
    %467 = vmatpush1.msra.mxu0 %v330
    %468 = vmatprep.subr.mxu0 0.0
    %469 = vmatpush1.msra.mxu0 %v331
    %470 = vmatprep.subr.mxu0 0.0
    %471 = vmatpush1.msra.mxu0 %v332
    %472 = vmatprep.subr.mxu0 0.0
    %473 = vmatpush1.msra.mxu0 %v333
    %474 = vmatprep.subr.mxu0 0.0
    %475 = vmatpush1.msra.mxu0 %v334
    %476 = vmatprep.mubr.f32.mxu0 %v270
    %477 = vmatmul.mubr.f32.gmra.mrb[0].mxu0 %v269
    %v478 = vpop.f32.mrb[0].mxu0
    %v479 = vadd.f32 %v409, %v478
    %v480 = vpop.f32.mrb[0].mxu0
    %481 = vdwg.mxu0
    %482 = vst [vmem:[#allocation8] sm:$0xff] %v479
    // Predicated region
    $region34: #{tpu_custom_call.1} parent=1 // pred_check
      _
    $region35: #{tpu_custom_call.1} parent=1 // pred_check_branch
      %484 = sbr.rel (0) target = $region37
    $region36: #{tpu_custom_call.1} parent=1 // pred_region
      %s486 = ssub.s32 128, 128
      %487 = vsyncadd [#allocation4], %s486
      %s489 = sshll.u32 [#allocation8], 4
      %s490 = int_to_ptr.vmem [resolvable:$true] %s489
      %492 = dma.vmem_to_hbm [thread:$0]  %s490, 128, %s5, [#allocation4]
    $region37: #{tpu_custom_call.1} parent=1 // pred_fallthru
      _
    // Predicated region
    $region38: #{tpu_custom_call.1} parent=1 // pred_check
      _
    $region39: #{tpu_custom_call.1} parent=1 // pred_check_branch
      %494 = sbr.rel (0) target = $region41
    $region40: #{tpu_custom_call.1} parent=1 // pred_region
      %495 = dma.done [#allocation4], 128
    $region41: #{tpu_custom_call.1} parent=1 // pred_fallthru
      _
    %496 = vsyncpa [#allocation3], 1
    %497 = vsyncpa [#allocation6], 1
    %498 = vsyncpa [#allocation4], 1

</llo_original>
